<compile_context>
chip_gen: v7x
topology: tpu7x:2x2x1
jax: 0.10.0
libtpu: 0.0.40
codegen_flags: <defaults>
</compile_context>

<pallas_src>
import functools

import jax
import jax.numpy as jnp
from jax.experimental import pallas as pl
from jax.experimental.pallas import tpu as pltpu


def _accuracy_kernel(out_ref, tgt_ref, res_ref, acc_ref, *,
                     topk, scale, batch, tile_b):
    i = pl.program_id(0)

    # Zero the running correct-count on the first batch tile.
    @pl.when(i == 0)
    def _():
        acc_ref[...] = jnp.zeros_like(acc_ref)

    logits = out_ref[...]                                   # (TB, C) native dtype
    target = tgt_ref[...]                                   # (TB, 1) int32
    TB, C = logits.shape

    # Row-validity mask for the (possibly padded) last tile.
    row_ids = jax.lax.broadcasted_iota(jnp.int32, (TB, 1), 0) + i * tile_b
    row_valid = row_ids < batch                             # (TB, 1) bool

    # One-hot mask of the target class per row -> gather target logit by max.
    col_ids = jax.lax.broadcasted_iota(jnp.int32, (TB, C), 1)
    tgt_mask = col_ids == target                            # (TB, C) bool
    neg_fill = jnp.full((), jnp.finfo(logits.dtype).min, dtype=logits.dtype)
    tgt_logit = jnp.max(jnp.where(tgt_mask, logits, neg_fill),
                        axis=-1, keepdims=True)             # (TB, 1)

    # Number of logits strictly greater than the target logit (f32 count).
    n_greater = jnp.sum((logits > tgt_logit).astype(jnp.float32),
                        axis=-1, keepdims=True)             # (TB, 1)

    # Row is correct iff the target logit is within the top-k; mask padded rows.
    correct = jnp.where(row_valid,
                        (n_greater < jnp.float32(topk)).astype(jnp.float32),
                        jnp.float32(0.0))                   # (TB, 1)

    acc_ref[...] += jnp.sum(correct)

    # Single scalar write + normalize, only on the final tile.
    @pl.when(i == pl.num_programs(0) - 1)
    def _():
        res_ref[...] = (acc_ref[...] * jnp.float32(scale / batch)
                        ).astype(jnp.float32)


def accuracy(output, target, topk=1, scale=1.0, block_b=None):
    """Pallas equivalent of Accuracy(topk, scale)(output, target).

    output: (B, C) float logits
    target: (B,)   int class labels
    returns: (1,) float32
    """
    if not jnp.issubdtype(output.dtype, jnp.floating):
        output = output.astype(jnp.float32)
    B, C = output.shape
    target_2d = target.astype(jnp.int32).reshape(B, 1)

    # Pick a batch-tile size: largest multiple of 8 whose (TB, C) tile stays
    # within a per-buffer VMEM budget (double-buffered by BlockSpec), capped
    # so the kernel fits comfortably on v7x (64 MiB physical VMEM) as well.
    if block_b is None:
        bytes_per_row = C * output.dtype.itemsize
        budget_bytes = 8 * 1024 * 1024          # per input buffer
        tb = max(8, min(1024, budget_bytes // max(1, bytes_per_row)))
        tb = (tb // 8) * 8
        block_b = B if B <= tb else tb
    tile_b = int(block_b)
    grid_b = pl.cdiv(B, tile_b)

    kernel = functools.partial(_accuracy_kernel, topk=int(topk),
                               scale=float(scale), batch=int(B),
                               tile_b=tile_b)

    res = pl.pallas_call(
        kernel,
        out_shape=jax.ShapeDtypeStruct((1, 1), jnp.float32),
        grid_spec=pltpu.PrefetchScalarGridSpec(
            num_scalar_prefetch=0,
            grid=(grid_b,),
            in_specs=[
                pl.BlockSpec((tile_b, C), lambda i: (i, 0)),   # logits tile
                pl.BlockSpec((tile_b, 1), lambda i: (i, 0)),   # targets tile
            ],
            out_specs=pl.BlockSpec((1, 1), lambda i: (0, 0)),  # resident output
            scratch_shapes=[pltpu.VMEM((1, 1), jnp.float32)],  # running count
        ),
        compiler_params=pltpu.CompilerParams(
            dimension_semantics=("arbitrary",),     # reduction over batch tiles
            vmem_limit_bytes=64 * 1024 * 1024,
        ),
    )(output, target_2d)

    return res.reshape(1)  # match torch's shape-(1,) result


def _ref_accuracy(output, target, topk, scale):
    top_idx = jax.lax.top_k(output.astype(jnp.float32), topk)[1]   # (B, k)
    correct = (top_idx == target[:, None]).any(axis=1)
    return (correct.sum() / output.shape[0] * scale).astype(jnp.float32)


if __name__ == "__main__":
    key = jax.random.PRNGKey(0)
    k_logits, k_labels, k_logits2, k_labels2 = jax.random.split(key, 4)

    # Case 1: small single-tile path (B=8, C=16), topk=3.
    B, C = 8, 16
    topk, scale = 3, 1.0
    output = jax.random.normal(k_logits, (B, C), dtype=jnp.float32)
    target = jax.random.randint(k_labels, (B,), 0, C, dtype=jnp.int32)

    acc = accuracy(output, target, topk=topk, scale=scale)
    jax.block_until_ready(acc)
    ref = _ref_accuracy(output, target, topk, scale)
    assert jnp.allclose(acc[0], ref), (acc, ref)

    # Case 2: exercise the tiled/accumulator path with a padded last tile
    # (B=20 rows, TB=8 -> 3 grid steps, last tile half-padded), bf16 logits.
    B2, C2 = 20, 32
    topk2, scale2 = 2, 100.0
    output2 = jax.random.normal(k_logits2, (B2, C2), dtype=jnp.bfloat16)
    target2 = jax.random.randint(k_labels2, (B2,), 0, C2, dtype=jnp.int32)

    acc2 = accuracy(output2, target2, topk=topk2, scale=scale2, block_b=8)
    jax.block_until_ready(acc2)
    ref2 = _ref_accuracy(output2, target2, topk2, scale2)
    assert jnp.allclose(acc2[0], ref2), (acc2, ref2)

    print("KERNEL_OK")
</pallas_src>

<mosaic_0001>
module attributes {stable_mosaic.version = 11 : i64} {
  func.func @_accuracy_kernel(%arg0: i32, %arg1: memref<8x16xf32, #tpu.memory_space<vmem>>, %arg2: memref<8x1xi32, #tpu.memory_space<vmem>>, %arg3: memref<1x1xf32, #tpu.memory_space<vmem>>, %arg4: memref<1x1xf32, #tpu.memory_space<vmem>>) attributes {dimension_semantics = [#tpu.dimension_semantics<arbitrary>], iteration_bounds = array<i64: 1>, scalar_prefetch = 0 : i64, scratch_operands = 1 : i64, tpu.core_type = #tpu.core_type<tc>, window_params = [{transform_indices = @transform_0, window_bounds = array<i64: 8, 16>}, {transform_indices = @transform_1, window_bounds = array<i64: 8, 1>}, {pipeline_mode = #tpu.pipeline_mode<synchronous>, transform_indices = @transform_2, window_bounds = array<i64: 1, 1>}]} {
    %c0_i32 = arith.constant 0 : i32
    %0 = arith.cmpi eq, %arg0, %c0_i32 : i32
    %1 = arith.extui %0 : i1 to i32
    %c0_i32_0 = arith.constant 0 : i32
    %2 = arith.cmpi ne, %1, %c0_i32_0 : i32
    scf.if %2 {
      %cst_16 = arith.constant 0.000000e+00 : f32
      %41 = vector.broadcast %cst_16 : f32 to vector<1x1xf32>
      %c0_17 = arith.constant 0 : index
      %c0_18 = arith.constant 0 : index
      %42 = vector.load %arg4[%c0_17, %c0_18] : memref<1x1xf32, #tpu.memory_space<vmem>>, vector<1x1xf32>
      tpu.vector_store %arg4[%c0_17, %c0_18], %41 {strides = array<i32>} : memref<1x1xf32, #tpu.memory_space<vmem>>, vector<1x1xf32>,
    } else {
    }
    %c0 = arith.constant 0 : index
    %c0_1 = arith.constant 0 : index
    %3 = vector.load %arg1[%c0, %c0_1] : memref<8x16xf32, #tpu.memory_space<vmem>>, vector<8x16xf32>
    %c0_2 = arith.constant 0 : index
    %c0_3 = arith.constant 0 : index
    %4 = vector.load %arg2[%c0_2, %c0_3] : memref<8x1xi32, #tpu.memory_space<vmem>>, vector<8x1xi32>
    %5 = tpu.iota {dimensions = array<i32: 0>} : vector<8x1xi32>
    %c8_i32 = arith.constant 8 : i32
    %6 = arith.muli %arg0, %c8_i32 : i32
    %7 = vector.broadcast %6 : i32 to vector<8x1xi32>
    %8 = arith.addi %5, %7 : vector<8x1xi32>
    %c8_i32_4 = arith.constant 8 : i32
    %9 = vector.broadcast %c8_i32_4 : i32 to vector<8x1xi32>
    %10 = arith.cmpi slt, %8, %9 : vector<8x1xi32>
    %11 = tpu.iota {dimensions = array<i32: 1>} : vector<8x16xi32>
    %12 = vector.broadcast %4 : vector<8x1xi32> to vector<8x16xi32>
    %13 = arith.cmpi eq, %11, %12 : vector<8x16xi32>
    %cst = arith.constant -3.40282347E+38 : f32
    %14 = vector.broadcast %cst : f32 to vector<8x16xf32>
    %15 = arith.select %13, %3, %14 : vector<8x16xi1>, vector<8x16xf32>
    %cst_5 = arith.constant dense<0xFF800000> : vector<8xf32>
    %16 = vector.multi_reduction <maximumf>, %15, %cst_5 [1] : vector<8x16xf32> to vector<8xf32>
    %17 = vector.shape_cast %16 : vector<8xf32> to vector<8x1xf32>
    %18 = vector.broadcast %17 : vector<8x1xf32> to vector<8x16xf32>
    %19 = arith.cmpf ogt, %3, %18 : vector<8x16xf32>
    %20 = arith.extui %19 : vector<8x16xi1> to vector<8x16xi32>
    %21 = arith.sitofp %20 : vector<8x16xi32> to vector<8x16xf32>
    %cst_6 = arith.constant dense<0.000000e+00> : vector<8xf32>
    %22 = vector.multi_reduction <add>, %21, %cst_6 [1] : vector<8x16xf32> to vector<8xf32>
    %23 = vector.shape_cast %22 : vector<8xf32> to vector<8x1xf32>
    %cst_7 = arith.constant 3.000000e+00 : f32
    %24 = vector.broadcast %cst_7 : f32 to vector<8x1xf32>
    %25 = arith.cmpf olt, %23, %24 : vector<8x1xf32>
    %26 = arith.extui %25 : vector<8x1xi1> to vector<8x1xi32>
    %27 = arith.sitofp %26 : vector<8x1xi32> to vector<8x1xf32>
    %cst_8 = arith.constant 0.000000e+00 : f32
    %28 = vector.broadcast %cst_8 : f32 to vector<8x1xf32>
    %29 = arith.select %10, %27, %28 : vector<8x1xi1>, vector<8x1xf32>
    %c0_9 = arith.constant 0 : index
    %c0_10 = arith.constant 0 : index
    %30 = vector.load %arg4[%c0_9, %c0_10] : memref<1x1xf32, #tpu.memory_space<vmem>>, vector<1x1xf32>
    %31 = vector.shape_cast %29 : vector<8x1xf32> to vector<1x8x1xf32>
    %cst_11 = arith.constant dense<0.000000e+00> : vector<1xf32>
    %32 = vector.multi_reduction <add>, %31, %cst_11 [1, 2] : vector<1x8x1xf32> to vector<1xf32>
    %33 = vector.shape_cast %32 : vector<1xf32> to vector<1x1x1xf32>
    %34 = vector.extract %33[0, 0, 0] : f32 from vector<1x1x1xf32>
    %35 = vector.broadcast %34 : f32 to vector<1x1xf32>
    %36 = arith.addf %30, %35 : vector<1x1xf32>
    %c0_12 = arith.constant 0 : index
    %c0_13 = arith.constant 0 : index
    %37 = vector.load %arg4[%c0_12, %c0_13] : memref<1x1xf32, #tpu.memory_space<vmem>>, vector<1x1xf32>
    tpu.vector_store %arg4[%c0_12, %c0_13], %36 {strides = array<i32>} : memref<1x1xf32, #tpu.memory_space<vmem>>, vector<1x1xf32>,
    %c0_i32_14 = arith.constant 0 : i32
    %38 = arith.cmpi eq, %arg0, %c0_i32_14 : i32
    %39 = arith.extui %38 : i1 to i32
    %c0_i32_15 = arith.constant 0 : i32
    %40 = arith.cmpi ne, %39, %c0_i32_15 : i32
    scf.if %40 {
      %c0_16 = arith.constant 0 : index
      %c0_17 = arith.constant 0 : index
      %41 = vector.load %arg4[%c0_16, %c0_17] : memref<1x1xf32, #tpu.memory_space<vmem>>, vector<1x1xf32>
      %cst_18 = arith.constant 1.250000e-01 : f32
      %42 = vector.broadcast %cst_18 : f32 to vector<1x1xf32>
      %43 = arith.mulf %41, %42 : vector<1x1xf32>
      %c0_19 = arith.constant 0 : index
      %c0_20 = arith.constant 0 : index
      %44 = vector.load %arg3[%c0_19, %c0_20] : memref<1x1xf32, #tpu.memory_space<vmem>>, vector<1x1xf32>
      tpu.vector_store %arg3[%c0_19, %c0_20], %43 {strides = array<i32>} : memref<1x1xf32, #tpu.memory_space<vmem>>, vector<1x1xf32>,
    } else {
    }
    return
  }
  func.func @transform_0(%arg0: i32) -> (i32, i32) {
    %c0_i32 = arith.constant 0 : i32
    %c0_i32_0 = arith.constant 0 : i32
    return %arg0, %c0_i32 : i32, i32
  }
  func.func @transform_1(%arg0: i32) -> (i32, i32) {
    %c0_i32 = arith.constant 0 : i32
    %c0_i32_0 = arith.constant 0 : i32
    return %arg0, %c0_i32 : i32, i32
  }
  func.func @transform_2(%arg0: i32) -> (i32, i32) {
    %c0_i32 = arith.constant 0 : i32
    %c0_i32_0 = arith.constant 0 : i32
    %c0_i32_1 = arith.constant 0 : i32
    return %c0_i32, %c0_i32_0 : i32, i32
  }
}

</mosaic_0001>

<llo_original>
// kernel: tpu_custom_call.1
$region0: #{tpu_custom_call.1}
  #allocation0 [shape = 'u32[]', space=smem, size = 0x4, offset = 0x4, fixed_abs, tag = 'smem constant byte address 0x4 - core index']
  #allocation1 [shape = 'u32[144,128]{1,0:T(1,128)}', space=vmem, size = 0x12000, scoped, tag = 'internal scratch']
  #allocation2 [shape = 'f32[1,1]{1,0:T(1,128)}', space=vmem, size = 0x200, scoped, tag = 'scratch operand']
  %s0 = inlined_call_operand.hbm [shape: f32[8,16], index: 0, kind: input, shape index: {}]
  %s1 = inlined_call_operand.hbm [shape: s32[8,1], index: 1, kind: input, shape index: {}]
  %s2 = inlined_call_operand.hbm [shape: f32[1,1], index: 2, kind: output, shape index: {}]
  %s3 = sld [smem:[#allocation0]]
  $region34: #{tpu_custom_call.1} parent=0
    _
  %s5 = ssub.s32 1, %s3
  %s6 = scalar_select 0, %s5, %s3
  $region1: #{tpu_custom_call.1} parent=0
    #allocation3 [shape = 'u8[4096]{0}', space=vmem, size = 0x1000, scoped, tag = 'input window, operand 0, single buffered']
    #allocation4 [shape = 's32[1]{0}', space=sflag, size = 0x4, scoped, tag = 'scoped memory for tpu_custom_call.1']
    #allocation5 [shape = 's32[1]{0}', space=sflag, size = 0x4, scoped, tag = 'scoped memory for tpu_custom_call.1']
    #allocation6 [shape = 'u8[4096]{0}', space=vmem, size = 0x1000, scoped, tag = 'input window, operand 1, single buffered']
    #allocation7 [shape = 's32[1]{0}', space=sflag, size = 0x4, scoped, tag = 'scoped memory for tpu_custom_call.1']
    #allocation8 [shape = 'u8[512]{0}', space=vmem, size = 0x400, scoped, tag = 'output window, operand 0, single buffered']
    %7 = vsyncpa [#allocation4], 0
    %8 = vsyncpa [#allocation7], 0
    %9 = vsyncpa [#allocation5], 0
    // Predicated region
    $region2: #{tpu_custom_call.1} parent=1 // pred_check
      _
    $region3: #{tpu_custom_call.1} parent=1 // pred_check_branch
      %11 = sbr.rel (0) target = $region5
    $region4: #{tpu_custom_call.1} parent=1 // pred_region
      %s13 = ssub.s32 128, 128
      %14 = vsyncadd [#allocation4], %s13
      %s16 = sshll.u32 [#allocation3], 4
      %s17 = int_to_ptr.vmem [resolvable:$true] %s16
      %19 = dma.hbm_to_vmem [thread:$0]  %s0, 128, %s17, [#allocation4]
    $region5: #{tpu_custom_call.1} parent=1 // pred_fallthru
      _
    // Predicated region
    $region6: #{tpu_custom_call.1} parent=1 // pred_check
      _
    $region7: #{tpu_custom_call.1} parent=1 // pred_check_branch
      %21 = sbr.rel (0) target = $region9
    $region8: #{tpu_custom_call.1} parent=1 // pred_region
      %s23 = ssub.s32 128, 128
      %24 = vsyncadd [#allocation7], %s23
      %s26 = sshll.u32 [#allocation6], 4
      %s27 = int_to_ptr.vmem [resolvable:$true] %s26
      %29 = dma.hbm_to_vmem [thread:$0]  %s1, 128, %s27, [#allocation7]
    $region9: #{tpu_custom_call.1} parent=1 // pred_fallthru
      _
    // Predicated region
    $region10: #{tpu_custom_call.1} parent=1 // pred_check
      _
    $region11: #{tpu_custom_call.1} parent=1 // pred_check_branch
      %31 = sbr.rel (0) target = $region13
    $region12: #{tpu_custom_call.1} parent=1 // pred_region
      %32 = dma.done [#allocation4], 128
    $region13: #{tpu_custom_call.1} parent=1 // pred_fallthru
      _
    // Predicated region
    $region14: #{tpu_custom_call.1} parent=1 // pred_check
      _
    $region15: #{tpu_custom_call.1} parent=1 // pred_check_branch
      %34 = sbr.rel (0) target = $region17
    $region16: #{tpu_custom_call.1} parent=1 // pred_region
      %35 = dma.done [#allocation7], 128
    $region17: #{tpu_custom_call.1} parent=1 // pred_fallthru
      _
    %p36 = scmp.eq.s32.totalorder 0, 0
    // Predicated region
    $region18: #{tpu_custom_call.1} parent=1 // pred_check
      %p37 = pneg %p36
    $region19: #{tpu_custom_call.1} parent=1 // pred_check_branch
      %39 = sbr.rel (%p37) target = $region21
    $region20: #{tpu_custom_call.1} parent=1 // pred_region
      %vm40 = vcmask 0
      %41 = vst.msk [vmem:[#allocation2] sm:$0x1] %vm40, 0.0
    $region21: #{tpu_custom_call.1} parent=1 // pred_fallthru
      _
    %v42 = vld [vmem:[#allocation3] sm:$0xff]
    %v43 = vld [vmem:[#allocation6] sm:$0xff]
    %v44 = vlaneseq
    %v45 = vshrl.u32 %v44, 7
    %s46 = smul.u32 0, 8
    %v47 = vstv %s46
    %v48 = vadd.s32 %v45, %v47
    %vm49 = vcmp.lt.s32.totalorder %v48, 8
    %v50 = vlaneseq
    %v51 = vand.u32 %v50, 127
    %52 = vset.pattern.permute.xlu0 0
    %53 = vperm.xlu0 %52, %v43
    %v54 = vpop.permute.xlu0 %53
    %vm55 = vcmp.eq.s32.totalorder %v51, %v54
    %v56 = vsel %vm55, %v42, -3.4028235e+38
    %vm57 = vcmask 130048
    %v58 = vsel %vm57, %v56, -inf
    %59 = vmax.xlane.f32.xlu0 %v58
    %v60 = vpop.xlane.xlu0 %59
    %vm61 = vcmp.gt.f32.partialorder %v42, %v60
    %v62 = vsel %vm61, 1, 0
    %v63 = vcvt.s32.f32 %v62
    %v64 = vsel %vm57, %v63, 0.0
    %65 = vadd.xlane.f32.xlu0 %v64
    %v66 = vpop.xlane.xlu0 %65
    %vm67 = vcmp.lt.f32.partialorder %v66, 3.0
    %v68 = vsel %vm67, 1, 0
    %v69 = vcvt.s32.f32 %v68
    %v70 = vsel %vm49, %v69, 0.0
    %v71 = vld [vmem:[#allocation2] sm:$0x1]
    %vm72 = vcmask 7168
    %v73 = vsel %vm72, %v70, 0.0
    %74 = vadd.xlane.f32.xlu0 %v73
    %v75 = vpop.xlane.xlu0 %74
    %v76 = vrot.slane %v75, 4
    %v77 = vadd.f32 %v75, %v76
    %v78 = vrot.slane %v77, 2
    %v79 = vadd.f32 %v77, %v78
    %v80 = vrot.slane %v79, 1
    %v81 = vadd.f32 %v79, %v80
    %s82 = vtos %v81
    %v83 = vstv %s82
    %v84 = vadd.f32 %v71, %v83
    %vm85 = vcmask 0
    %86 = vst.msk [vmem:[#allocation2] sm:$0x1] %vm85, %v84
    // Predicated region
    $region22: #{tpu_custom_call.1} parent=1 // pred_check
      %p87 = pneg %p36
    $region23: #{tpu_custom_call.1} parent=1 // pred_check_branch
      %89 = sbr.rel (%p87) target = $region25
    $region24: #{tpu_custom_call.1} parent=1 // pred_region
      %v90 = vld [vmem:[#allocation2] sm:$0x1]
      %v91 = vmul.f32 %v90, 0.125
      %92 = vst.msk [vmem:[#allocation8] sm:$0x1] %vm85, %v91
    $region25: #{tpu_custom_call.1} parent=1 // pred_fallthru
      _
    // Predicated region
    $region26: #{tpu_custom_call.1} parent=1 // pred_check
      _
    $region27: #{tpu_custom_call.1} parent=1 // pred_check_branch
      %94 = sbr.rel (0) target = $region29
    $region28: #{tpu_custom_call.1} parent=1 // pred_region
      %s96 = ssub.s32 16, 16
      %97 = vsyncadd [#allocation5], %s96
      %s99 = sshll.u32 [#allocation8], 4
      %s100 = int_to_ptr.vmem [resolvable:$true] %s99
      %102 = dma.vmem_to_hbm [thread:$0]  %s100, 16, %s2, [#allocation5]
    $region29: #{tpu_custom_call.1} parent=1 // pred_fallthru
      _
    // Predicated region
    $region30: #{tpu_custom_call.1} parent=1 // pred_check
      _
    $region31: #{tpu_custom_call.1} parent=1 // pred_check_branch
      %104 = sbr.rel (0) target = $region33
    $region32: #{tpu_custom_call.1} parent=1 // pred_region
      %105 = dma.done [#allocation5], 16
    $region33: #{tpu_custom_call.1} parent=1 // pred_fallthru
      _
    %106 = vsyncpa [#allocation4], 1
    %107 = vsyncpa [#allocation7], 1
    %108 = vsyncpa [#allocation5], 1

</llo_original>
